<compile_context>
chip_gen: v6e
topology: v6e:2x2x1
jax: 0.10.0
libtpu: 0.0.40
codegen_flags: <defaults>
</compile_context>

<pallas_src>
import jax
import jax.numpy as jnp
from jax.experimental import pallas as pl
from jax.experimental.pallas import tpu as pltpu


# Arrays at or below this many bytes run as a single block; larger arrays
# always get >= 2 grid steps so both v7x TensorCores get work.
_SINGLE_BLOCK_MAX_BYTES = 2 * 1024 * 1024
_VMEM_LIMIT_BYTES = 48 * 1024 * 1024


def _ceil_div(a: int, b: int) -> int:
    return -(-a // b)


def _round_up(a: int, b: int) -> int:
    return _ceil_div(a, b) * b


def _num_blocks(total_units: int, target_units: int) -> int:
    """>= 2 blocks, rounded up to an even count (v7x megacore balance)."""
    n = max(2, _ceil_div(total_units, target_units))
    return n + (n % 2)


def _swish_kernel(x_ref, o_ref):
    # Compute in f32 (free: kernel is HBM-bound) so bf16 inputs match the
    # fp32 PyTorch reference; stable sigmoid (lax.logistic) -> EUP, mul -> VPU.
    x = x_ref[...].astype(jnp.float32)
    o_ref[...] = (x * jax.nn.sigmoid(x)).astype(o_ref.dtype)


def _launch(x2d, block_shape, grid, index_map, donate):
    return pl.pallas_call(
        _swish_kernel,
        out_shape=jax.ShapeDtypeStruct(x2d.shape, x2d.dtype),
        grid_spec=pltpu.PrefetchScalarGridSpec(
            num_scalar_prefetch=0,
            grid=grid,
            in_specs=[pl.BlockSpec(block_shape, index_map)],
            out_specs=pl.BlockSpec(block_shape, index_map),
        ),
        compiler_params=pltpu.CompilerParams(
            dimension_semantics=("parallel",),
            vmem_limit_bytes=_VMEM_LIMIT_BYTES,
        ),
        input_output_aliases={0: 0} if donate else {},
    )(x2d)


def swish(x: jax.Array, *, target_block_bytes: int = 8 * 1024 * 1024,
          donate: bool = False) -> jax.Array:
    """Elementwise x * sigmoid(x), matching the PyTorch Swish module."""
    orig_shape = x.shape
    total = x.size
    if total == 0:
        return x
    itemsize = jnp.dtype(x.dtype).itemsize
    total_bytes = total * itemsize
    single_block_max = min(_SINGLE_BLOCK_MAX_BYTES, target_block_bytes)

    if total % 128 == 0:
        # Common path (all realistic NCHW activations): lane-dense 2D view,
        # rows blocked over the grid.  No padding, no slicing.
        lane = 128
        for cand in (1024, 512, 256):
            if total % cand == 0:
                lane = cand
                break
        rows = total // lane
        x2d = x.reshape(rows, lane)
        if total_bytes <= single_block_max:
            tile_rows = rows  # block == full array dims is always legal
        else:
            nblk = _num_blocks(total_bytes, target_block_bytes)
            # Multiple of 32 rows keeps bf16/int8/fp8 on packed-sublane tiles.
            tile_rows = min(rows, _round_up(_ceil_div(rows, nblk), 32))
        grid = (_ceil_div(rows, tile_rows),)
        out2d = _launch(x2d, (tile_rows, lane), grid, lambda i: (i, 0), donate)
    else:
        # Ragged element count: view as a single (1, total) row tiled along
        # lanes with grid = cdiv; Pallas masks the partial last block.  This
        # layout uses 1 of 8 sublanes per vreg (8x VMEM padding) so blocks
        # are kept 8x smaller; it is an edge case and still does exactly 1x
        # HBM traffic (vs. ~3x for the old pad + slice path).
        x2d = x.reshape(1, total)
        rag_target_bytes = max(4 * 1024, target_block_bytes // 8)
        blk_max = max(1024, (rag_target_bytes // itemsize) // 1024 * 1024)
        if total <= blk_max:
            blk = total  # single full-array block (legal for any size)
        else:
            nblk = _num_blocks(total, blk_max)
            blk = _round_up(_ceil_div(total, nblk), 1024)
        grid = (_ceil_div(total, blk),)
        out2d = _launch(x2d, (1, blk), grid, lambda i: (0, i), donate)

    return out2d.reshape(orig_shape)


if __name__ == "__main__":
    key = jax.random.PRNGKey(0)

    # Primary check: small NCHW activation, the shape implied by the module.
    x = jax.random.normal(key, (2, 4, 16, 16), dtype=jnp.float32)
    out = jax.block_until_ready(swish(x))
    ref = x * jax.nn.sigmoid(x)
    assert out.shape == x.shape and out.dtype == x.dtype
    assert jnp.allclose(out, ref, atol=1e-6, rtol=1e-6)

    # bf16 input (fp32-internal sigmoid, cast back to bf16).
    xb = jax.random.normal(jax.random.PRNGKey(1), (2, 4, 16, 16), dtype=jnp.bfloat16)
    outb = jax.block_until_ready(swish(xb))
    xbf = xb.astype(jnp.float32)
    refb = xbf * jax.nn.sigmoid(xbf)
    assert outb.dtype == jnp.bfloat16
    assert jnp.allclose(outb.astype(jnp.float32), refb, atol=1e-2, rtol=1e-2)

    # Default config, multi-block even grid (4 MiB array -> 2 blocks).
    x1 = jax.random.normal(jax.random.PRNGKey(2), (8, 32, 64, 64), dtype=jnp.float32)
    out1 = jax.block_until_ready(swish(x1))
    assert jnp.allclose(out1, x1 * jax.nn.sigmoid(x1), atol=1e-6, rtol=1e-6)

    # Multi-block 2D path with a ragged (masked) last block.
    x2 = jax.random.normal(jax.random.PRNGKey(3), (1, 8, 100, 100), dtype=jnp.float32)
    out2 = jax.block_until_ready(swish(x2, target_block_bytes=64 * 1024))
    assert jnp.allclose(out2, x2 * jax.nn.sigmoid(x2), atol=1e-6, rtol=1e-6)

    # Ragged element count (total % 128 != 0): single-block lane path.
    x3 = jax.random.normal(jax.random.PRNGKey(4), (3, 5, 7, 11), dtype=jnp.float32)
    out3 = jax.block_until_ready(swish(x3))
    assert jnp.allclose(out3, x3 * jax.nn.sigmoid(x3), atol=1e-6, rtol=1e-6)

    # Ragged element count, multi-block lane path with a masked last block.
    x4 = jax.random.normal(jax.random.PRNGKey(5), (3, 7, 31, 41), dtype=jnp.float32)
    out4 = jax.block_until_ready(swish(x4, target_block_bytes=64 * 1024))
    assert jnp.allclose(out4, x4 * jax.nn.sigmoid(x4), atol=1e-6, rtol=1e-6)

    # Donated-input path (output aliases the input buffer).
    x5 = jax.random.normal(jax.random.PRNGKey(6), (2, 4, 16, 16), dtype=jnp.float32)
    ref5 = x5 * jax.nn.sigmoid(x5)
    donating = jax.jit(lambda a: swish(a, donate=True), donate_argnums=(0,))
    out5 = jax.block_until_ready(donating(x5))
    assert jnp.allclose(out5, ref5, atol=1e-6, rtol=1e-6)

    print("KERNEL_OK")
</pallas_src>

<mosaic_0001>
module attributes {stable_mosaic.version = 11 : i64} {
  func.func @_swish_kernel(%arg0: i32, %arg1: memref<2x1024xf32, #tpu.memory_space<vmem>>, %arg2: memref<2x1024xf32, #tpu.memory_space<vmem>>) attributes {dimension_semantics = [#tpu.dimension_semantics<parallel>], iteration_bounds = array<i64: 1>, scalar_prefetch = 0 : i64, scratch_operands = 0 : i64, tpu.core_type = #tpu.core_type<tc>, window_params = [{transform_indices = @transform_0, window_bounds = array<i64: 2, 1024>}, {transform_indices = @transform_1, window_bounds = array<i64: 2, 1024>}]} {
    %c0 = arith.constant 0 : index
    %c0_0 = arith.constant 0 : index
    %0 = vector.load %arg1[%c0, %c0_0] : memref<2x1024xf32, #tpu.memory_space<vmem>>, vector<2x1024xf32>
    %1 = arith.negf %0 : vector<2x1024xf32>
    %2 = math.exp %1 : vector<2x1024xf32>
    %cst = arith.constant 1.000000e+00 : f32
    %3 = vector.broadcast %cst : f32 to vector<2x1024xf32>
    %4 = arith.addf %3, %2 : vector<2x1024xf32>
    %5 = arith.divf %3, %4 : vector<2x1024xf32>
    %6 = arith.mulf %0, %5 : vector<2x1024xf32>
    %c0_1 = arith.constant 0 : index
    %c0_2 = arith.constant 0 : index
    %7 = vector.load %arg2[%c0_1, %c0_2] : memref<2x1024xf32, #tpu.memory_space<vmem>>, vector<2x1024xf32>
    tpu.vector_store %arg2[%c0_1, %c0_2], %6 {strides = array<i32>} : memref<2x1024xf32, #tpu.memory_space<vmem>>, vector<2x1024xf32>,
    return
  }
  func.func @transform_0(%arg0: i32) -> (i32, i32) {
    %c0_i32 = arith.constant 0 : i32
    %c0_i32_0 = arith.constant 0 : i32
    return %arg0, %c0_i32 : i32, i32
  }
  func.func @transform_1(%arg0: i32) -> (i32, i32) {
    %c0_i32 = arith.constant 0 : i32
    %c0_i32_0 = arith.constant 0 : i32
    return %arg0, %c0_i32 : i32, i32
  }
}

</mosaic_0001>

<llo_original>
// kernel: tpu_custom_call.1
$region0: #{tpu_custom_call.1}
  #allocation0 [shape = 'u32[]', space=smem, size = 0x4, offset = 0x4, fixed_abs, tag = 'smem constant byte address 0x4 - core index']
  #allocation1 [shape = 'u32[144,128]{1,0:T(1,128)}', space=vmem, size = 0x12000, scoped, tag = 'internal scratch']
  %s0 = inlined_call_operand.hbm [shape: f32[2,1024], index: 0, kind: input, shape index: {}]
  %s1 = inlined_call_operand.hbm [shape: f32[2,1024], index: 1, kind: output, shape index: {}]
  %s2 = sld [smem:[#allocation0]]
  $region18: #{tpu_custom_call.1} parent=0
    _
  %s4 = ssub.s32 1, %s2
  %s5 = scalar_select 0, %s4, %s2
  $region1: #{tpu_custom_call.1} parent=0
    #allocation2 [shape = 'u8[8192]{0}', space=vmem, size = 0x2000, scoped, tag = 'input window, operand 0, single buffered']
    #allocation3 [shape = 's32[1]{0}', space=sflag, size = 0x4, scoped, tag = 'scoped memory for tpu_custom_call.1']
    #allocation4 [shape = 's32[1]{0}', space=sflag, size = 0x4, scoped, tag = 'scoped memory for tpu_custom_call.1']
    #allocation5 [shape = 'u8[8192]{0}', space=vmem, size = 0x2000, scoped, tag = 'output window, operand 0, single buffered']
    %6 = vsyncpa [#allocation3], 0
    %7 = vsyncpa [#allocation4], 0
    // Predicated region
    $region2: #{tpu_custom_call.1} parent=1 // pred_check
      _
    $region3: #{tpu_custom_call.1} parent=1 // pred_check_branch
      %9 = sbr.rel (0) target = $region5
    $region4: #{tpu_custom_call.1} parent=1 // pred_region
      %s11 = ssub.s32 256, 256
      %12 = vsyncadd [#allocation3], %s11
      %s14 = sshll.u32 [#allocation2], 4
      %s15 = int_to_ptr.vmem [resolvable:$true] %s14
      %17 = dma.hbm_to_vmem [thread:$0]  %s0, 256, %s15, [#allocation3]
    $region5: #{tpu_custom_call.1} parent=1 // pred_fallthru
      _
    // Predicated region
    $region6: #{tpu_custom_call.1} parent=1 // pred_check
      _
    $region7: #{tpu_custom_call.1} parent=1 // pred_check_branch
      %19 = sbr.rel (0) target = $region9
    $region8: #{tpu_custom_call.1} parent=1 // pred_region
      %20 = dma.done [#allocation3], 256
    $region9: #{tpu_custom_call.1} parent=1 // pred_fallthru
      _
    %v21 = vld [vmem:[#allocation2] sm:$0xff]
    %v22 = vld [vmem:[#allocation2 + $0x8] sm:$0xff]
    %v23 = vxor.u32 %v21, 2147483648
    %v24 = vxor.u32 %v22, 2147483648
    %v25 = vmul.f32 %v23, 1.442695
    %v26 = vpow.pop %v25
    %v27 = vmul.f32 %v24, 1.442695
    %v28 = vpow.pop %v27
    %v29 = vadd.f32 %v26, 1.0
    %v30 = vadd.f32 %v28, 1.0
    %v31 = vrcp.pop %v29
    %v32 = vmul.f32 1.0, %v31
    %v33 = vrcp.pop %v30
    %v34 = vmul.f32 1.0, %v33
    %v35 = vmul.f32 %v21, %v32
    %v36 = vmul.f32 %v22, %v34
    %37 = vst [vmem:[#allocation5] sm:$0xff] %v35
    %38 = vst [vmem:[#allocation5 + $0x8] sm:$0xff] %v36
    // Predicated region
    $region10: #{tpu_custom_call.1} parent=1 // pred_check
      _
    $region11: #{tpu_custom_call.1} parent=1 // pred_check_branch
      %40 = sbr.rel (0) target = $region13
    $region12: #{tpu_custom_call.1} parent=1 // pred_region
      %s42 = ssub.s32 256, 256
      %43 = vsyncadd [#allocation4], %s42
      %s45 = sshll.u32 [#allocation5], 4
      %s46 = int_to_ptr.vmem [resolvable:$true] %s45
      %48 = dma.vmem_to_hbm [thread:$0]  %s46, 256, %s1, [#allocation4]
    $region13: #{tpu_custom_call.1} parent=1 // pred_fallthru
      _
    // Predicated region
    $region14: #{tpu_custom_call.1} parent=1 // pred_check
      _
    $region15: #{tpu_custom_call.1} parent=1 // pred_check_branch
      %50 = sbr.rel (0) target = $region17
    $region16: #{tpu_custom_call.1} parent=1 // pred_region
      %51 = dma.done [#allocation4], 256
    $region17: #{tpu_custom_call.1} parent=1 // pred_fallthru
      _
    %52 = vsyncpa [#allocation3], 1
    %53 = vsyncpa [#allocation4], 1

</llo_original>
